<compile_context>
chip_gen: v5e
topology: v5e:2x2
jax: 0.10.0
libtpu: 0.0.40
codegen_flags: <defaults>
</compile_context>

<pallas_src>
import jax
import jax.numpy as jnp
from jax import lax
from jax.experimental import pallas as pl
from jax.experimental.pallas import tpu as pltpu

EPS = 1e-5

# rows of the packed (8, D) parameter slab
_ROW_G1, _ROW_BE1, _ROW_B1, _ROW_G2, _ROW_BE2, _ROW_W2 = 0, 1, 2, 3, 4, 5


def _net_kernel(x_ref, pvec_ref, w1_ref, b2_ref, o_ref):
    B = x_ref.shape[0]
    inv_b = 1.0 / B

    x = x_ref[...]                                            # (B, D) f32

    # ---- BatchNorm1d #1: one-pass stats, folded into scale+shift ----
    s1 = jnp.sum(x, axis=0, keepdims=True)                    # (1, D)
    s2 = jnp.sum(x * x, axis=0, keepdims=True)                # (1, D)
    mu1 = s1 * inv_b
    var1 = jnp.maximum(s2 * inv_b - mu1 * mu1, 0.0)           # clamp: avoid NaN
    a1 = pvec_ref[_ROW_G1:_ROW_G1 + 1, :] * lax.rsqrt(var1 + EPS)
    c1 = pvec_ref[_ROW_BE1:_ROW_BE1 + 1, :] - mu1 * a1
    xn = x * a1 + c1                                          # (B, D) f32

    # ---- Linear(D, D) on the MXU, bf16 operands, f32 accumulate ----
    h = jnp.dot(xn.astype(jnp.bfloat16), w1_ref[...],
                preferred_element_type=jnp.float32)           # (B, D) f32
    h = h + pvec_ref[_ROW_B1:_ROW_B1 + 1, :]

    # ---- BatchNorm1d #2: one-pass stats, folded scale+shift ----
    t1 = jnp.sum(h, axis=0, keepdims=True)
    t2 = jnp.sum(h * h, axis=0, keepdims=True)
    mu2 = t1 * inv_b
    var2 = jnp.maximum(t2 * inv_b - mu2 * mu2, 0.0)
    a2 = pvec_ref[_ROW_G2:_ROW_G2 + 1, :] * lax.rsqrt(var2 + EPS)
    c2 = pvec_ref[_ROW_BE2:_ROW_BE2 + 1, :] - mu2 * a2

    # ---- Tanh ----
    t = jnp.tanh(h * a2 + c2)                                 # (B, D) f32

    # ---- Linear(D, 1), emitted lane-dense as (1, B) ----
    w2row = pvec_ref[_ROW_W2:_ROW_W2 + 1, :]                  # (1, D)
    out = lax.dot_general(w2row, t,
                          dimension_numbers=(((1,), (1,)), ((), ())),
                          preferred_element_type=jnp.float32)  # (1, B)
    o_ref[...] = out + b2_ref[0, 0]


def net_forward(x, params):
    """x: (B, D) float32.  Returns (B,) float32 -- matches torch squeeze(-1)."""
    B, D = x.shape
    (g1, be1, w1, b1, g2, be2, w2, b2) = params

    # Pack the six (D,) parameter vectors into one (8, D) VMEM slab.
    zrow = jnp.zeros((D,), jnp.float32)
    pvec = jnp.stack([g1, be1, b1, g2, be2, w2[:, 0], zrow, zrow], axis=0)

    w1_bf16 = w1.astype(jnp.bfloat16)           # (D_in, D_out), MXU operand
    b2_smem = b2.reshape(1, 1).astype(jnp.float32)

    # VMEM budget: x + packed params + bf16 W1 + output, with headroom.
    needed = B * D * 4 + 8 * D * 4 + D * D * 2 + B * 4
    vmem_limit = int(min(100 * (1 << 20), max(2 * needed + (1 << 20), 16 * (1 << 20))))

    vmem = pl.BlockSpec(memory_space=pltpu.MemorySpace.VMEM)
    smem = pl.BlockSpec(memory_space=pltpu.MemorySpace.SMEM)

    out = pl.pallas_call(
        _net_kernel,
        out_shape=jax.ShapeDtypeStruct((1, B), jnp.float32),
        in_specs=[vmem, vmem, vmem, smem],
        out_specs=vmem,
        compiler_params=pltpu.CompilerParams(vmem_limit_bytes=vmem_limit),
    )(x, pvec, w1_bf16, b2_smem)
    return out[0]                                # (B,)  == squeeze(-1)


def init_params(key, D):
    """Deterministic synthetic parameters matching the torch module shapes."""
    ks = jax.random.split(key, 6)
    g1 = jnp.ones((D,), jnp.float32)
    be1 = jnp.zeros((D,), jnp.float32)
    # torch Linear(D, D): weight (D, D); store transposed (in, out)
    w1 = jax.random.normal(ks[0], (D, D), jnp.float32) * 0.1
    b1 = jax.random.normal(ks[1], (D,), jnp.float32) * 0.1
    g2 = jnp.ones((D,), jnp.float32) + 0.05 * jax.random.normal(ks[2], (D,), jnp.float32)
    be2 = 0.05 * jax.random.normal(ks[3], (D,), jnp.float32)
    # torch Linear(D, 1): weight (1, D); store transposed (D, 1)
    w2 = jax.random.normal(ks[4], (D, 1), jnp.float32) * 0.1
    b2 = jax.random.normal(ks[5], (1,), jnp.float32) * 0.1
    return (g1, be1, w1, b1, g2, be2, w2, b2)


def net_forward_ref(x, params):
    """Pure-JAX f32 reference (training-mode BN semantics)."""
    (g1, be1, w1, b1, g2, be2, w2, b2) = params
    mu1 = x.mean(0); v1 = ((x - mu1) ** 2).mean(0)
    xn = (x - mu1) / jnp.sqrt(v1 + EPS) * g1 + be1
    h = xn @ w1 + b1
    mu2 = h.mean(0); v2 = ((h - mu2) ** 2).mean(0)
    hn = (h - mu2) / jnp.sqrt(v2 + EPS) * g2 + be2
    t = jnp.tanh(hn)
    return (t @ w2 + b2)[:, 0]


if __name__ == "__main__":
    key = jax.random.PRNGKey(0)
    B, D = 8, 32
    kx, kp = jax.random.split(key)
    x = jax.random.normal(kx, (B, D), jnp.float32)
    params = init_params(kp, D)

    y = net_forward(x, params)
    y = jax.block_until_ready(y)

    y_ref = net_forward_ref(x, params)
    assert y.shape == (B,)
    # bf16 MXU operands for the (D,D) matmul -> loosen tolerance vs f32 ref.
    assert jnp.allclose(y, y_ref, atol=2e-2, rtol=2e-2), (y, y_ref)
    print("KERNEL_OK")
</pallas_src>

<mosaic_0001>
module attributes {stable_mosaic.version = 11 : i64} {
  func.func @_net_kernel(%arg0: memref<8x32xf32, #tpu.memory_space<vmem>>, %arg1: memref<8x32xf32, #tpu.memory_space<vmem>>, %arg2: memref<32x32xbf16, #tpu.memory_space<vmem>>, %arg3: memref<1x1xf32, #tpu.memory_space<smem>>, %arg4: memref<1x8xf32, #tpu.memory_space<vmem>>) attributes {dimension_semantics = [], scalar_prefetch = 0 : i64, scratch_operands = 0 : i64, tpu.core_type = #tpu.core_type<tc>} {
    %c0 = arith.constant 0 : index
    %c0_0 = arith.constant 0 : index
    %0 = vector.load %arg0[%c0, %c0_0] : memref<8x32xf32, #tpu.memory_space<vmem>>, vector<8x32xf32>
    %cst = arith.constant dense<0.000000e+00> : vector<32xf32>
    %1 = vector.multi_reduction <add>, %0, %cst [0] : vector<8x32xf32> to vector<32xf32>
    %2 = vector.shape_cast %1 : vector<32xf32> to vector<1x32xf32>
    %3 = arith.mulf %0, %0 : vector<8x32xf32>
    %cst_1 = arith.constant dense<0.000000e+00> : vector<32xf32>
    %4 = vector.multi_reduction <add>, %3, %cst_1 [0] : vector<8x32xf32> to vector<32xf32>
    %5 = vector.shape_cast %4 : vector<32xf32> to vector<1x32xf32>
    %cst_2 = arith.constant 1.250000e-01 : f32
    %6 = vector.broadcast %cst_2 : f32 to vector<1x32xf32>
    %7 = arith.mulf %2, %6 : vector<1x32xf32>
    %cst_3 = arith.constant 1.250000e-01 : f32
    %8 = vector.broadcast %cst_3 : f32 to vector<1x32xf32>
    %9 = arith.mulf %5, %8 : vector<1x32xf32>
    %10 = arith.mulf %7, %7 : vector<1x32xf32>
    %11 = arith.subf %9, %10 : vector<1x32xf32>
    %cst_4 = arith.constant 0.000000e+00 : f32
    %12 = vector.broadcast %cst_4 : f32 to vector<1x32xf32>
    %13 = arith.maximumf %11, %12 : vector<1x32xf32>
    %c0_5 = arith.constant 0 : index
    %c0_6 = arith.constant 0 : index
    %14 = vector.load %arg1[%c0_5, %c0_6] : memref<8x32xf32, #tpu.memory_space<vmem>>, vector<1x32xf32>
    %cst_7 = arith.constant 9.99999974E-6 : f32
    %15 = vector.broadcast %cst_7 : f32 to vector<1x32xf32>
    %16 = arith.addf %13, %15 : vector<1x32xf32>
    %17 = math.rsqrt %16 : vector<1x32xf32>
    %18 = arith.mulf %14, %17 : vector<1x32xf32>
    %c1 = arith.constant 1 : index
    %c0_8 = arith.constant 0 : index
    %19 = vector.load %arg1[%c1, %c0_8] : memref<8x32xf32, #tpu.memory_space<vmem>>, vector<1x32xf32>
    %20 = arith.mulf %7, %18 : vector<1x32xf32>
    %21 = arith.subf %19, %20 : vector<1x32xf32>
    %22 = vector.broadcast %18 : vector<1x32xf32> to vector<8x32xf32>
    %23 = arith.mulf %0, %22 : vector<8x32xf32>
    %24 = vector.broadcast %21 : vector<1x32xf32> to vector<8x32xf32>
    %25 = arith.addf %23, %24 : vector<8x32xf32>
    %26 = arith.truncf %25 : vector<8x32xf32> to vector<8x32xbf16>
    %c0_9 = arith.constant 0 : index
    %c0_10 = arith.constant 0 : index
    %27 = vector.load %arg2[%c0_9, %c0_10] : memref<32x32xbf16, #tpu.memory_space<vmem>>, vector<32x32xbf16>
    %cst_11 = arith.constant dense<0.000000e+00> : vector<8x32xf32>
    %28 = tpu.matmul %26, %27, %cst_11 {dimension_numbers = #tpu.dot_dimension_numbers<[1], [0], [0], [1], [0, 0, 1, 1], [], []>} : vector<8x32xbf16>, vector<32x32xbf16>, vector<8x32xf32> -> vector<8x32xf32>
    %c2 = arith.constant 2 : index
    %c0_12 = arith.constant 0 : index
    %29 = vector.load %arg1[%c2, %c0_12] : memref<8x32xf32, #tpu.memory_space<vmem>>, vector<1x32xf32>
    %30 = vector.broadcast %29 : vector<1x32xf32> to vector<8x32xf32>
    %31 = arith.addf %28, %30 : vector<8x32xf32>
    %cst_13 = arith.constant dense<0.000000e+00> : vector<32xf32>
    %32 = vector.multi_reduction <add>, %31, %cst_13 [0] : vector<8x32xf32> to vector<32xf32>
    %33 = vector.shape_cast %32 : vector<32xf32> to vector<1x32xf32>
    %34 = arith.mulf %31, %31 : vector<8x32xf32>
    %cst_14 = arith.constant dense<0.000000e+00> : vector<32xf32>
    %35 = vector.multi_reduction <add>, %34, %cst_14 [0] : vector<8x32xf32> to vector<32xf32>
    %36 = vector.shape_cast %35 : vector<32xf32> to vector<1x32xf32>
    %cst_15 = arith.constant 1.250000e-01 : f32
    %37 = vector.broadcast %cst_15 : f32 to vector<1x32xf32>
    %38 = arith.mulf %33, %37 : vector<1x32xf32>
    %cst_16 = arith.constant 1.250000e-01 : f32
    %39 = vector.broadcast %cst_16 : f32 to vector<1x32xf32>
    %40 = arith.mulf %36, %39 : vector<1x32xf32>
    %41 = arith.mulf %38, %38 : vector<1x32xf32>
    %42 = arith.subf %40, %41 : vector<1x32xf32>
    %cst_17 = arith.constant 0.000000e+00 : f32
    %43 = vector.broadcast %cst_17 : f32 to vector<1x32xf32>
    %44 = arith.maximumf %42, %43 : vector<1x32xf32>
    %c3 = arith.constant 3 : index
    %c0_18 = arith.constant 0 : index
    %45 = vector.load %arg1[%c3, %c0_18] : memref<8x32xf32, #tpu.memory_space<vmem>>, vector<1x32xf32>
    %cst_19 = arith.constant 9.99999974E-6 : f32
    %46 = vector.broadcast %cst_19 : f32 to vector<1x32xf32>
    %47 = arith.addf %44, %46 : vector<1x32xf32>
    %48 = math.rsqrt %47 : vector<1x32xf32>
    %49 = arith.mulf %45, %48 : vector<1x32xf32>
    %c4 = arith.constant 4 : index
    %c0_20 = arith.constant 0 : index
    %50 = vector.load %arg1[%c4, %c0_20] : memref<8x32xf32, #tpu.memory_space<vmem>>, vector<1x32xf32>
    %51 = arith.mulf %38, %49 : vector<1x32xf32>
    %52 = arith.subf %50, %51 : vector<1x32xf32>
    %53 = vector.broadcast %49 : vector<1x32xf32> to vector<8x32xf32>
    %54 = arith.mulf %31, %53 : vector<8x32xf32>
    %55 = vector.broadcast %52 : vector<1x32xf32> to vector<8x32xf32>
    %56 = arith.addf %54, %55 : vector<8x32xf32>
    %57 = math.tanh %56 : vector<8x32xf32>
    %c5 = arith.constant 5 : index
    %c0_21 = arith.constant 0 : index
    %58 = vector.load %arg1[%c5, %c0_21] : memref<8x32xf32, #tpu.memory_space<vmem>>, vector<1x32xf32>
    %cst_22 = arith.constant dense<0.000000e+00> : vector<1x8xf32>
    %59 = tpu.matmul %58, %57, %cst_22 {dimension_numbers = #tpu.dot_dimension_numbers<[1], [1], [0], [0], [0, 0, 1, 0], [], []>} : vector<1x32xf32>, vector<8x32xf32>, vector<1x8xf32> -> vector<1x8xf32>
    %c0_23 = arith.constant 0 : index
    %c0_24 = arith.constant 0 : index
    %60 = memref.load %arg3[%c0_23, %c0_24] : memref<1x1xf32, #tpu.memory_space<smem>>
    %61 = vector.broadcast %60 : f32 to vector<1x8xf32>
    %62 = arith.addf %59, %61 : vector<1x8xf32>
    %c0_25 = arith.constant 0 : index
    %c0_26 = arith.constant 0 : index
    %63 = vector.load %arg4[%c0_25, %c0_26] : memref<1x8xf32, #tpu.memory_space<vmem>>, vector<1x8xf32>
    tpu.vector_store %arg4[%c0_25, %c0_26], %62 {strides = array<i32>} : memref<1x8xf32, #tpu.memory_space<vmem>>, vector<1x8xf32>,
    return
  }
}

</mosaic_0001>

<llo_original>
// kernel: tpu_custom_call.1
$region0: #{tpu_custom_call.1}
  #allocation0 [shape = 'u32[]', space=smem, size = 0x4, offset = 0x4, fixed_abs, tag = 'smem constant byte address 0x4 - core index']
  #allocation1 [shape = 'u32[72,128]{1,0:T(1,128)}', space=vmem, size = 0x9000, scoped, tag = 'internal scratch']
  #allocation2 [shape = 'f32[1,1]{1,0:T(1,128)S(6)}', space=smem, size = 0x200, scoped, tag = 'scoped memory for tpu_custom_call.1']
  %s0 = inlined_call_operand.hbm [shape: f32[8,32], index: 0, kind: input, shape index: {}]
  %s1 = inlined_call_operand.hbm [shape: f32[8,32], index: 1, kind: input, shape index: {}]
  %s2 = inlined_call_operand.hbm [shape: bf16[32,32], index: 2, kind: input, shape index: {}]
  %s3 = inlined_call_operand.<no memory space> [shape: f32[1,1], index: 3, kind: input, shape index: {}]
  %s4 = inlined_call_operand.hbm [shape: f32[1,8], index: 4, kind: output, shape index: {}]
  %s5 = sld [smem:[#allocation0]]
  $region38: #{tpu_custom_call.1} parent=0
    _
  %s7 = ssub.s32 1, %s5
  %s8 = scalar_select 0, %s7, %s5
  %9 = sst [smem:[#allocation2]] %s3
  $region1: #{tpu_custom_call.1} parent=0
    #allocation3 [shape = 'u8[4096]{0}', space=vmem, size = 0x1000, scoped, tag = 'input window, operand 0, single buffered']
    #allocation4 [shape = 's32[1]{0}', space=sflag, size = 0x4, scoped, tag = 'scoped memory for tpu_custom_call.1']
    #allocation5 [shape = 's32[1]{0}', space=sflag, size = 0x4, scoped, tag = 'scoped memory for tpu_custom_call.1']
    #allocation6 [shape = 'u8[4096]{0}', space=vmem, size = 0x1000, scoped, tag = 'input window, operand 1, single buffered']
    #allocation7 [shape = 's32[1]{0}', space=sflag, size = 0x4, scoped, tag = 'scoped memory for tpu_custom_call.1']
    #allocation8 [shape = 'u8[8192]{0}', space=vmem, size = 0x2000, scoped, tag = 'input window, operand 2, single buffered']
    #allocation9 [shape = 'u8[512]{0}', space=vmem, size = 0x400, scoped, tag = 'output window, operand 0, single buffered']
    %10 = vsyncpa [#allocation4], 0
    %11 = vsyncpa [#allocation7], 0
    %12 = vsyncpa [#allocation5], 0
    // Predicated region
    $region2: #{tpu_custom_call.1} parent=1 // pred_check
      _
    $region3: #{tpu_custom_call.1} parent=1 // pred_check_branch
      %14 = sbr.rel (0) target = $region5
    $region4: #{tpu_custom_call.1} parent=1 // pred_region
      %16 = vsyncadd [#allocation4], 0
      %s18 = sshll.u32 %s0, 4
      %s19 = int_to_ptr.hbm [resolvable:$true] %s18
      %s20 = sshll.u32 [#allocation3], 4
      %s21 = int_to_ptr.vmem [resolvable:$true] %s20
      %23 = dma.hbm_to_vmem [thread:$0]  %s19, 128, %s21, [#allocation4]
    $region5: #{tpu_custom_call.1} parent=1 // pred_fallthru
      _
    // Predicated region
    $region6: #{tpu_custom_call.1} parent=1 // pred_check
      _
    $region7: #{tpu_custom_call.1} parent=1 // pred_check_branch
      %25 = sbr.rel (0) target = $region9
    $region8: #{tpu_custom_call.1} parent=1 // pred_region
      %27 = vsyncadd [#allocation7], 0
      %s29 = sshll.u32 %s1, 4
      %s30 = int_to_ptr.hbm [resolvable:$true] %s29
      %s31 = sshll.u32 [#allocation6], 4
      %s32 = int_to_ptr.vmem [resolvable:$true] %s31
      %34 = dma.hbm_to_vmem [thread:$0]  %s30, 128, %s32, [#allocation7]
    $region9: #{tpu_custom_call.1} parent=1 // pred_fallthru
      _
    // Predicated region
    $region10: #{tpu_custom_call.1} parent=1 // pred_check
      _
    $region11: #{tpu_custom_call.1} parent=1 // pred_check_branch
      %36 = sbr.rel (0) target = $region13
    $region12: #{tpu_custom_call.1} parent=1 // pred_region
      %38 = vsyncadd [#allocation7], 0
      %s39 = sshll.u32 %s2, 4
      %s40 = int_to_ptr.hbm [resolvable:$true] %s39
      %s41 = sshll.u32 [#allocation8], 4
      %s42 = int_to_ptr.vmem [resolvable:$true] %s41
      %47 = dma.hbm_to_vmem [thread:$0]  %s40, 256, %s42, [#allocation7], 64, 64, 4
    $region13: #{tpu_custom_call.1} parent=1 // pred_fallthru
      _
    // Predicated region
    $region14: #{tpu_custom_call.1} parent=1 // pred_check
      _
    $region15: #{tpu_custom_call.1} parent=1 // pred_check_branch
      %49 = sbr.rel (0) target = $region17
    $region16: #{tpu_custom_call.1} parent=1 // pred_region
      _
    $region17: #{tpu_custom_call.1} parent=1 // pred_fallthru
      _
    // Predicated region
    $region18: #{tpu_custom_call.1} parent=1 // pred_check
      _
    $region19: #{tpu_custom_call.1} parent=1 // pred_check_branch
      %51 = sbr.rel (0) target = $region21
    $region20: #{tpu_custom_call.1} parent=1 // pred_region
      %53 = dma.done [#allocation4], 128
    $region21: #{tpu_custom_call.1} parent=1 // pred_fallthru
      _
    // Predicated region
    $region22: #{tpu_custom_call.1} parent=1 // pred_check
      _
    $region23: #{tpu_custom_call.1} parent=1 // pred_check_branch
      %55 = sbr.rel (0) target = $region25
    $region24: #{tpu_custom_call.1} parent=1 // pred_region
      %57 = dma.done [#allocation7], 128
    $region25: #{tpu_custom_call.1} parent=1 // pred_fallthru
      _
    // Predicated region
    $region26: #{tpu_custom_call.1} parent=1 // pred_check
      _
    $region27: #{tpu_custom_call.1} parent=1 // pred_check_branch
      %59 = sbr.rel (0) target = $region29
    $region28: #{tpu_custom_call.1} parent=1 // pred_region
      %61 = dma.done [#allocation7], 256
    $region29: #{tpu_custom_call.1} parent=1 // pred_fallthru
      _
    %v63 = vld [vmem:[#allocation3] sm:$0xff]
    %vm64 = vcmask 261120
    %v65 = vsel %vm64, %v63, 0.0
    %v66 = vrot.slane %v65, 4
    %v67 = vadd.f32 %v65, %v66
    %v68 = vrot.slane %v67, 2
    %v69 = vadd.f32 %v67, %v68
    %v70 = vrot.slane %v69, 1
    %v71 = vadd.f32 %v69, %v70
    %v72 = vmul.f32 %v63, %v63
    %v73 = vsel %vm64, %v72, 0.0
    %v74 = vrot.slane %v73, 4
    %v75 = vadd.f32 %v73, %v74
    %v76 = vrot.slane %v75, 2
    %v77 = vadd.f32 %v75, %v76
    %v78 = vrot.slane %v77, 1
    %v79 = vadd.f32 %v77, %v78
    %v80 = vmul.f32 %v71, 0.125
    %v81 = vmul.f32 %v79, 0.125
    %v82 = vmul.f32 %v80, %v80
    %v83 = vsub.f32 %v81, %v82
    %v84 = vmax.f32 %v83, 0.0
    %v85 = vld [vmem:[#allocation6] sm:$0x1]
    %v86 = vadd.f32 %v84, 1e-05
    %v87 = vrsqrt.pop %v86
    %v88 = vmul.f32 %v87, %v86
    %v89 = vmul.f32 %v88, %v87
    %v90 = vmul.f32 0.5, %v89
    %v91 = vsub.f32 1.5, %v90
    %v92 = vmul.f32 %v87, %v91
    %vm93 = vweird.f32 %v86
    %vm94 = vweird.f32 %v87
    %vm95 = vmor %vm93, %vm94
    %v96 = vsel %vm95, %v87, %v92
    %v97 = vmul.f32 %v85, %v96
    %v98 = vld [vmem:[#allocation6 + $0x1] sm:$0x1]
    %v99 = vmul.f32 %v80, %v97
    %v100 = vsub.f32 %v98, %v99
    %v101 = vperm.slane %v97, 0
    %v102 = vmul.f32 %v63, %v101
    %v103 = vperm.slane %v100, 0
    %v104 = vadd.f32 %v102, %v103
    %v105 = vpack.c.bf16 %v104, %v104
    %v106 = vld [vmem:[#allocation8] sm:$0xf]
    %v107 = vld [vmem:[#allocation8 + $0x4] sm:$0xf]
    %v108 = vld [vmem:[#allocation8 + $0x8] sm:$0xf]
    %v109 = vld [vmem:[#allocation8 + $0xc] sm:$0xf]
    %v110 = vld [vmem:[#allocation6 + $0x2] sm:$0x1]
    %v111 = vperm.slane %v110, 0
    %v116 = vunpack.c.l.b16 %v106
    %v117 = vunpack.c.l.b16 %v107
    %v118 = vunpack.c.l.b16 %v108
    %v119 = vunpack.c.l.b16 %v109
    %v120 = vpack.c.b16 %v117, %v116
    %v121 = vpack.c.b16 %v119, %v118
    %v125 = vsel %vm64, %v105, 0
    %127 = vmatpush.bf16.msra.mxu0 0
    %128 = vmatpush.bf16.msra.mxu0 0
    %129 = vmatpush.bf16.msra.mxu0 0
    %130 = vmatpush.bf16.msra.mxu0 0
    %131 = vmatpush.bf16.msra.mxu0 0
    %132 = vmatpush.bf16.msra.mxu0 0
    %133 = vmatpush.bf16.msra.mxu0 %v121
    %134 = vmatpush.bf16.msra.mxu0 %v120
    %135 = vmatmul.bf16.gmra.mxu0 %v125
    %v136 = vpop.f32.mrf.mxu0
    %v137 = vadd.f32 %v111, %v136
    %v138 = vpop.f32.mrf.mxu0
    %139 = vdwg.mxu0
    %v140 = vsel %vm64, %v137, 0.0
    %v141 = vrot.slane %v140, 4
    %v142 = vadd.f32 %v140, %v141
    %v143 = vrot.slane %v142, 2
    %v144 = vadd.f32 %v142, %v143
    %v145 = vrot.slane %v144, 1
    %v146 = vadd.f32 %v144, %v145
    %v147 = vmul.f32 %v137, %v137
    %v148 = vsel %vm64, %v147, 0.0
    %v149 = vrot.slane %v148, 4
    %v150 = vadd.f32 %v148, %v149
    %v151 = vrot.slane %v150, 2
    %v152 = vadd.f32 %v150, %v151
    %v153 = vrot.slane %v152, 1
    %v154 = vadd.f32 %v152, %v153
    %v155 = vmul.f32 %v146, 0.125
    %v156 = vmul.f32 %v154, 0.125
    %v157 = vmul.f32 %v155, %v155
    %v158 = vsub.f32 %v156, %v157
    %v159 = vmax.f32 %v158, 0.0
    %v160 = vld [vmem:[#allocation6 + $0x3] sm:$0x1]
    %v161 = vadd.f32 %v159, 1e-05
    %v162 = vrsqrt.pop %v161
    %v163 = vmul.f32 %v162, %v161
    %v164 = vmul.f32 %v163, %v162
    %v165 = vmul.f32 0.5, %v164
    %v166 = vsub.f32 1.5, %v165
    %v167 = vmul.f32 %v162, %v166
    %vm168 = vweird.f32 %v161
    %vm169 = vweird.f32 %v162
    %vm170 = vmor %vm168, %vm169
    %v171 = vsel %vm170, %v162, %v167
    %v172 = vmul.f32 %v160, %v171
    %v173 = vld [vmem:[#allocation6 + $0x4] sm:$0x1]
    %v174 = vmul.f32 %v155, %v172
    %v175 = vsub.f32 %v173, %v174
    %v176 = vperm.slane %v172, 0
    %v177 = vmul.f32 %v137, %v176
    %v178 = vperm.slane %v175, 0
    %v179 = vadd.f32 %v177, %v178
    %v180 = vtanh.pop %v179
    %v181 = vld [vmem:[#allocation6 + $0x5] sm:$0x1]
    %s182 = sld [smem:[#allocation2]]
    %v183 = vstv %s182
    %v185 = vsel %vm64, %v181, 0
    %v188 = vsel %vm64, %v180, 0
    %190 = vmatpush.xpose.msra.mxu0 0.0
    %191 = vmatpush.xpose.msra.mxu0 0.0
    %192 = vmatpush.xpose.msra.mxu0 0.0
    %193 = vmatpush.xpose.msra.mxu0 0.0
    %194 = vmatpush.xpose.msra.mxu0 0.0
    %195 = vmatpush.xpose.msra.mxu0 0.0
    %196 = vmatpush.xpose.msra.mxu0 0.0
    %197 = vmatpush.xpose.msra.mxu0 0.0
    %198 = vmatpush.xpose.msra.mxu0 0.0
    %199 = vmatpush.xpose.msra.mxu0 0.0
    %200 = vmatpush.xpose.msra.mxu0 0.0
    %201 = vmatpush.xpose.msra.mxu0 0.0
    %202 = vmatpush.xpose.msra.mxu0 0.0
    %203 = vmatpush.xpose.msra.mxu0 0.0
    %204 = vmatpush.xpose.msra.mxu0 0.0
    %205 = vmatpush.xpose.msra.mxu0 %v188
    %206 = vmatmul.f32.gmra.mxu0 %v185
    %v207 = vpop.f32.mrf.mxu0
    %v208 = vadd.f32 %v183, %v207
    %209 = vdwg.mxu0
    %vm210 = vcmask 57344
    %211 = vst.msk [vmem:[#allocation9] sm:$0x1] %vm210, %v208
    // Predicated region
    $region30: #{tpu_custom_call.1} parent=1 // pred_check
      _
    $region31: #{tpu_custom_call.1} parent=1 // pred_check_branch
      %213 = sbr.rel (0) target = $region33
    $region32: #{tpu_custom_call.1} parent=1 // pred_region
      %215 = vsyncadd [#allocation5], 0
      %s217 = sshll.u32 [#allocation9], 4
      %s218 = int_to_ptr.vmem [resolvable:$true] %s217
      %s219 = sshll.u32 %s4, 4
      %s220 = int_to_ptr.hbm [resolvable:$true] %s219
      %222 = dma.vmem_to_hbm [thread:$0]  %s218, 16, %s220, [#allocation5]
    $region33: #{tpu_custom_call.1} parent=1 // pred_fallthru
      _
    // Predicated region
    $region34: #{tpu_custom_call.1} parent=1 // pred_check
      _
    $region35: #{tpu_custom_call.1} parent=1 // pred_check_branch
      %224 = sbr.rel (0) target = $region37
    $region36: #{tpu_custom_call.1} parent=1 // pred_region
      %226 = dma.done [#allocation5], 16
    $region37: #{tpu_custom_call.1} parent=1 // pred_fallthru
      _
    %227 = vsyncpa [#allocation4], 1
    %228 = vsyncpa [#allocation7], 1
    %229 = vsyncpa [#allocation5], 1

</llo_original>
